<compile_context>
chip_gen: v7x
topology: tpu7x:2x2x1
jax: 0.10.0
libtpu: 0.0.40
codegen_flags: <defaults>
</compile_context>

<pallas_src>
import numpy as np
import jax
import jax.numpy as jnp
from jax.experimental import pallas as pl
from jax.experimental.pallas import tpu as pltpu


# -----------------------------------------------------------------------------
# Pallas kernel: ONE invocation over the whole (B, N) prompt set.
#  * All wrapper affine ops (+0.5, /(W,H), 2x-1, *2*pi) are folded into the
#    precomputed rows of `prm` (see prepare_params), so the kernel consumes raw
#    pixel-space points and there are no extra tiny XLA launches.
#  * The K=2 "matmul" is a VPU broadcast-FMA (no MXU push/pop latency).
#  * The sin/cos concat is replaced by duplicated, phase-shifted frequency rows
#    so a single full-width sin() produces [sin | cos] lane-contiguously
#    (one EUP pass instead of sin + cos + an XLU concat).
#  * The label embeddings are applied with a fused select chain (mutually
#    exclusive labels -> 3 selects + 1 add instead of 3 selects + 2 adds).
#  * The pad row is written in-kernel (no wrapper concatenates).
#  * All parameters travel in one (8, E) sublane-padded array -> one DMA.
# -----------------------------------------------------------------------------
def prompt_encoder_kernel(pts_ref, lbl_ref, prm_ref, out_ref):
    # pts_ref: (B, N, 2)  raw (un-normalized, un-shifted) point coordinates
    # lbl_ref: (B, N, 1)  float labels (-1 = pad/ignore, 0, 1)
    # prm_ref: (8, E)     rows: [gx, gy, bias(+phase), not_a_point, pe0, pe1, 0, 0]
    # out_ref: (B, Np, E) with Np = N (+1 if padded)
    prm = prm_ref[...]
    gx = prm[0:1]      # (1, E)
    gy = prm[1:2]
    bias = prm[2:3]
    nap = prm[3:4]
    pe0 = prm[4:5]
    pe1 = prm[5:6]

    pts = pts_ref[...]                      # (B, N, 2)
    px = pts[:, :, 0:1]                     # (B, N, 1)
    py = pts[:, :, 1:2]

    # proj already includes the 2*pi scaling, the [0,1] normalization, the
    # 2x-1 affine and the +0.5 shift (folded into gx/gy/bias); the second half
    # of `bias` carries a +pi/2 phase so sin() emits cos() on those lanes.
    proj = px * gx + py * gy + bias         # (B, N, E) VPU broadcast-FMA
    pe = jnp.sin(proj)                      # [sin(proj_h) | cos(proj_h)]

    lbl = lbl_ref[...]                      # (B, N, 1)
    neg = lbl < 0.0
    eq0 = lbl == 0.0
    eq1 = lbl == 1.0

    # labels<0: PE replaced by not_a_point; labels==0/1: add learned embed.
    base = jnp.where(neg, nap, pe)
    add = jnp.where(eq0, pe0, jnp.where(eq1, pe1, 0.0))
    out = base + add

    B, N, _ = pts_ref.shape
    Np = out_ref.shape[1]
    if Np == N:                             # static: pad=False -> single full store
        out_ref[...] = out.astype(out_ref.dtype)
    else:                                   # static: pad=True -> pad rows = nap
        out_ref[:, :N, :] = out.astype(out_ref.dtype)
        out_ref[:, N:, :] = jnp.broadcast_to(
            nap, (B, Np - N, out_ref.shape[2])).astype(out_ref.dtype)


# -----------------------------------------------------------------------------
# Parameter prep (done once; static image size folded into constants).
#   coords = (p + 0.5) / [W, H]; c = 2*coords - 1; proj = 2*pi * (c @ g)
#   => proj = p_x * (4*pi/W)*g[0] + p_y * (4*pi/H)*g[1]
#             + 2*pi*((1/W - 1)*g[0] + (1/H - 1)*g[1])
# Frequencies/bias are duplicated to width E with a +pi/2 phase on the second
# half so one sin() produces both sin and cos.
# -----------------------------------------------------------------------------
def prepare_params(params, input_image_size):
    gauss = params["gaussian"].astype(jnp.float32)        # (2, Eh)
    nap = params["not_a_point"].astype(jnp.float32)       # (1, E)
    pe0 = params["point_embed_0"].astype(jnp.float32)     # (1, E)
    pe1 = params["point_embed_1"].astype(jnp.float32)     # (1, E)
    E = nap.shape[-1]
    H, W = input_image_size
    two_pi = jnp.float32(2.0 * np.pi)

    gx = (2.0 * two_pi / W) * gauss[0]                                   # (Eh,)
    gy = (2.0 * two_pi / H) * gauss[1]                                   # (Eh,)
    b = two_pi * ((1.0 / W - 1.0) * gauss[0] + (1.0 / H - 1.0) * gauss[1])

    gx2 = jnp.concatenate([gx, gx])                                      # (E,)
    gy2 = jnp.concatenate([gy, gy])
    b2 = jnp.concatenate([b, b + jnp.float32(np.pi / 2.0)])

    zeros = jnp.zeros((E,), jnp.float32)
    prm = jnp.stack([gx2, gy2, b2, nap[0], pe0[0], pe1[0], zeros, zeros])
    return prm.astype(jnp.float32)                                       # (8, E)


# -----------------------------------------------------------------------------
# Wrapper: single pallas_call, no grid loop over batch, no wrapper concats.
# -----------------------------------------------------------------------------
def prompt_encoder_forward(points, labels, pad, prm, embed_dim):
    B, N, _ = points.shape
    Np = N + 1 if pad else N
    E = embed_dim

    points = points.astype(jnp.float32)
    labels3 = labels.astype(jnp.float32)[..., None]       # (B, N, 1)

    out = pl.pallas_call(
        prompt_encoder_kernel,
        out_shape=jax.ShapeDtypeStruct((B, Np, E), jnp.float32),
        grid=(1,),
        in_specs=[
            pl.BlockSpec((B, N, 2), lambda i: (0, 0, 0)),
            pl.BlockSpec((B, N, 1), lambda i: (0, 0, 0)),
            pl.BlockSpec((8, E), lambda i: (0, 0)),
        ],
        out_specs=pl.BlockSpec((B, Np, E), lambda i: (0, 0, 0)),
        compiler_params=pltpu.CompilerParams(
            dimension_semantics=("arbitrary",)),
    )(points, labels3, prm)
    return out


# -----------------------------------------------------------------------------
# Pure-JAX reference (mirrors the PyTorch forward exactly) for a sanity check.
# -----------------------------------------------------------------------------
def prompt_encoder_reference(points, labels, pad, params, input_image_size):
    gauss = params["gaussian"]
    nap = params["not_a_point"]
    pe0 = params["point_embed_0"]
    pe1 = params["point_embed_1"]
    H, W = input_image_size

    points = points.astype(jnp.float32) + 0.5
    labels = labels.astype(jnp.float32)
    B = points.shape[0]
    if pad:
        points = jnp.concatenate(
            [points, jnp.zeros((B, 1, 2), jnp.float32)], axis=1)
        labels = jnp.concatenate(
            [labels, -jnp.ones((B, 1), jnp.float32)], axis=1)

    coords = points / jnp.array([W, H], dtype=jnp.float32)
    c = 2.0 * coords - 1.0
    proj = 2.0 * np.pi * (c @ gauss)
    pe = jnp.concatenate([jnp.sin(proj), jnp.cos(proj)], axis=-1)

    l = labels[..., None]
    out = jnp.where(l < 0.0, nap[None], pe)
    out = out + jnp.where(l == 0.0, pe0[None], 0.0)
    out = out + jnp.where(l == 1.0, pe1[None], 0.0)
    return out


if __name__ == "__main__":
    # Module config: embed_dim=32, input_image_size=(16, 16)
    embed_dim = 32
    input_image_size = (16, 16)
    Eh = embed_dim // 2

    key = jax.random.PRNGKey(0)
    k_g, k_n, k_p0, k_p1, k_pts, k_lbl = jax.random.split(key, 6)

    # Deterministic "parameters" (scale=1.0 gaussian matrix; nn.Embedding ~ N(0,1))
    params = {
        "gaussian": jax.random.normal(k_g, (2, Eh), jnp.float32),
        "not_a_point": jax.random.normal(k_n, (1, embed_dim), jnp.float32),
        "point_embed_0": jax.random.normal(k_p0, (1, embed_dim), jnp.float32),
        "point_embed_1": jax.random.normal(k_p1, (1, embed_dim), jnp.float32),
    }

    # Fold static image size + affine chain + phase trick into one (8, E) array.
    prm = prepare_params(params, input_image_size)

    # Example inputs: B=2 batches of N=8 points in a 16x16 image, labels in {0,1}
    B, N = 2, 8
    points = jax.random.uniform(
        k_pts, (B, N, 2), jnp.float32, 0.0, float(input_image_size[0]))
    labels = jax.random.randint(k_lbl, (B, N), 0, 2).astype(jnp.float32)

    # pad=True path (the common SAM prompt-encoder case)
    out_pad = jax.block_until_ready(
        prompt_encoder_forward(points, labels, True, prm, embed_dim))
    ref_pad = prompt_encoder_reference(points, labels, True, params,
                                       input_image_size)
    np.testing.assert_allclose(np.asarray(out_pad), np.asarray(ref_pad),
                               rtol=1e-5, atol=1e-4)

    # pad=False path (single full-tile store)
    out_np = jax.block_until_ready(
        prompt_encoder_forward(points, labels, False, prm, embed_dim))
    ref_np = prompt_encoder_reference(points, labels, False, params,
                                      input_image_size)
    np.testing.assert_allclose(np.asarray(out_np), np.asarray(ref_np),
                               rtol=1e-5, atol=1e-4)

    print("KERNEL_OK")
</pallas_src>

<mosaic_0001>
module attributes {stable_mosaic.version = 11 : i64} {
  func.func @prompt_encoder_kernel(%arg0: i32, %arg1: memref<2x8x2xf32, #tpu.memory_space<vmem>>, %arg2: memref<2x8x1xf32, #tpu.memory_space<vmem>>, %arg3: memref<8x32xf32, #tpu.memory_space<vmem>>, %arg4: memref<2x9x32xf32, #tpu.memory_space<vmem>>) attributes {dimension_semantics = [#tpu.dimension_semantics<arbitrary>], iteration_bounds = array<i64: 1>, scalar_prefetch = 0 : i64, scratch_operands = 0 : i64, tpu.core_type = #tpu.core_type<tc>, window_params = [{pipeline_mode = #tpu.pipeline_mode<synchronous>, transform_indices = @transform_0, window_bounds = array<i64: 2, 8, 2>}, {pipeline_mode = #tpu.pipeline_mode<synchronous>, transform_indices = @transform_1, window_bounds = array<i64: 2, 8, 1>}, {pipeline_mode = #tpu.pipeline_mode<synchronous>, transform_indices = @transform_2, window_bounds = array<i64: 8, 32>}, {pipeline_mode = #tpu.pipeline_mode<synchronous>, transform_indices = @transform_3, window_bounds = array<i64: 2, 9, 32>}]} {
    %c0 = arith.constant 0 : index
    %c0_0 = arith.constant 0 : index
    %0 = vector.load %arg3[%c0, %c0_0] : memref<8x32xf32, #tpu.memory_space<vmem>>, vector<8x32xf32>
    %1 = vector.extract_strided_slice %0 {offsets = [0, 0], sizes = [1, 32], strides = [1, 1]} : vector<8x32xf32> to vector<1x32xf32>
    %2 = vector.extract_strided_slice %0 {offsets = [1, 0], sizes = [1, 32], strides = [1, 1]} : vector<8x32xf32> to vector<1x32xf32>
    %3 = vector.extract_strided_slice %0 {offsets = [2, 0], sizes = [1, 32], strides = [1, 1]} : vector<8x32xf32> to vector<1x32xf32>
    %4 = vector.extract_strided_slice %0 {offsets = [3, 0], sizes = [1, 32], strides = [1, 1]} : vector<8x32xf32> to vector<1x32xf32>
    %5 = vector.extract_strided_slice %0 {offsets = [4, 0], sizes = [1, 32], strides = [1, 1]} : vector<8x32xf32> to vector<1x32xf32>
    %6 = vector.extract_strided_slice %0 {offsets = [5, 0], sizes = [1, 32], strides = [1, 1]} : vector<8x32xf32> to vector<1x32xf32>
    %c0_1 = arith.constant 0 : index
    %c0_2 = arith.constant 0 : index
    %c0_3 = arith.constant 0 : index
    %7 = vector.load %arg1[%c0_1, %c0_2, %c0_3] : memref<2x8x2xf32, #tpu.memory_space<vmem>>, vector<2x8x2xf32>
    %8 = vector.extract_strided_slice %7 {offsets = [0, 0, 0], sizes = [2, 8, 1], strides = [1, 1, 1]} : vector<2x8x2xf32> to vector<2x8x1xf32>
    %9 = vector.extract_strided_slice %7 {offsets = [0, 0, 1], sizes = [2, 8, 1], strides = [1, 1, 1]} : vector<2x8x2xf32> to vector<2x8x1xf32>
    %10 = vector.shape_cast %1 : vector<1x32xf32> to vector<1x1x32xf32>
    %11 = vector.broadcast %8 : vector<2x8x1xf32> to vector<2x8x32xf32>
    %12 = vector.broadcast %10 : vector<1x1x32xf32> to vector<2x8x32xf32>
    %13 = arith.mulf %11, %12 : vector<2x8x32xf32>
    %14 = vector.shape_cast %2 : vector<1x32xf32> to vector<1x1x32xf32>
    %15 = vector.broadcast %9 : vector<2x8x1xf32> to vector<2x8x32xf32>
    %16 = vector.broadcast %14 : vector<1x1x32xf32> to vector<2x8x32xf32>
    %17 = arith.mulf %15, %16 : vector<2x8x32xf32>
    %18 = arith.addf %13, %17 : vector<2x8x32xf32>
    %19 = vector.shape_cast %3 : vector<1x32xf32> to vector<1x1x32xf32>
    %20 = vector.broadcast %19 : vector<1x1x32xf32> to vector<2x8x32xf32>
    %21 = arith.addf %18, %20 : vector<2x8x32xf32>
    %22 = math.sin %21 : vector<2x8x32xf32>
    %c0_4 = arith.constant 0 : index
    %c0_5 = arith.constant 0 : index
    %c0_6 = arith.constant 0 : index
    %23 = vector.load %arg2[%c0_4, %c0_5, %c0_6] : memref<2x8x1xf32, #tpu.memory_space<vmem>>, vector<2x8x1xf32>
    %cst = arith.constant 0.000000e+00 : f32
    %24 = vector.broadcast %cst : f32 to vector<2x8x1xf32>
    %25 = arith.cmpf olt, %23, %24 : vector<2x8x1xf32>
    %cst_7 = arith.constant 0.000000e+00 : f32
    %26 = vector.broadcast %cst_7 : f32 to vector<2x8x1xf32>
    %27 = arith.cmpf oeq, %23, %26 : vector<2x8x1xf32>
    %cst_8 = arith.constant 1.000000e+00 : f32
    %28 = vector.broadcast %cst_8 : f32 to vector<2x8x1xf32>
    %29 = arith.cmpf oeq, %23, %28 : vector<2x8x1xf32>
    %30 = vector.shape_cast %25 : vector<2x8x1xi1> to vector<2x8x1xi1>
    %31 = vector.broadcast %30 : vector<2x8x1xi1> to vector<2x8x32xi1>
    %32 = vector.shape_cast %4 : vector<1x32xf32> to vector<1x1x32xf32>
    %33 = vector.broadcast %32 : vector<1x1x32xf32> to vector<2x8x32xf32>
    %34 = arith.select %31, %33, %22 : vector<2x8x32xi1>, vector<2x8x32xf32>
    %cst_9 = arith.constant 0.000000e+00 : f32
    %35 = vector.shape_cast %29 : vector<2x8x1xi1> to vector<2x8x1xi1>
    %36 = vector.broadcast %35 : vector<2x8x1xi1> to vector<2x8x32xi1>
    %37 = vector.shape_cast %6 : vector<1x32xf32> to vector<1x1x32xf32>
    %38 = vector.broadcast %37 : vector<1x1x32xf32> to vector<2x8x32xf32>
    %39 = vector.broadcast %cst_9 : f32 to vector<2x8x32xf32>
    %40 = arith.select %36, %38, %39 : vector<2x8x32xi1>, vector<2x8x32xf32>
    %41 = vector.shape_cast %27 : vector<2x8x1xi1> to vector<2x8x1xi1>
    %42 = vector.broadcast %41 : vector<2x8x1xi1> to vector<2x8x32xi1>
    %43 = vector.shape_cast %5 : vector<1x32xf32> to vector<1x1x32xf32>
    %44 = vector.broadcast %43 : vector<1x1x32xf32> to vector<2x8x32xf32>
    %45 = arith.select %42, %44, %40 : vector<2x8x32xi1>, vector<2x8x32xf32>
    %46 = arith.addf %34, %45 : vector<2x8x32xf32>
    %c0_10 = arith.constant 0 : index
    %c0_11 = arith.constant 0 : index
    %c0_12 = arith.constant 0 : index
    %47 = vector.load %arg4[%c0_10, %c0_11, %c0_12] : memref<2x9x32xf32, #tpu.memory_space<vmem>>, vector<2x8x32xf32>
    tpu.vector_store %arg4[%c0_10, %c0_11, %c0_12], %46 {strides = array<i32>} : memref<2x9x32xf32, #tpu.memory_space<vmem>>, vector<2x8x32xf32>,
    %48 = vector.shape_cast %4 : vector<1x32xf32> to vector<1x1x32xf32>
    %49 = vector.broadcast %48 : vector<1x1x32xf32> to vector<2x1x32xf32>
    %c0_13 = arith.constant 0 : index
    %c8 = arith.constant 8 : index
    %c0_14 = arith.constant 0 : index
    %50 = vector.load %arg4[%c0_13, %c8, %c0_14] : memref<2x9x32xf32, #tpu.memory_space<vmem>>, vector<2x1x32xf32>
    tpu.vector_store %arg4[%c0_13, %c8, %c0_14], %49 {strides = array<i32>} : memref<2x9x32xf32, #tpu.memory_space<vmem>>, vector<2x1x32xf32>,
    return
  }
  func.func @transform_0(%arg0: i32) -> (i32, i32, i32) {
    %c0_i32 = arith.constant 0 : i32
    %c0_i32_0 = arith.constant 0 : i32
    %c0_i32_1 = arith.constant 0 : i32
    %c0_i32_2 = arith.constant 0 : i32
    return %c0_i32, %c0_i32_0, %c0_i32_1 : i32, i32, i32
  }
  func.func @transform_1(%arg0: i32) -> (i32, i32, i32) {
    %c0_i32 = arith.constant 0 : i32
    %c0_i32_0 = arith.constant 0 : i32
    %c0_i32_1 = arith.constant 0 : i32
    %c0_i32_2 = arith.constant 0 : i32
    return %c0_i32, %c0_i32_0, %c0_i32_1 : i32, i32, i32
  }
  func.func @transform_2(%arg0: i32) -> (i32, i32) {
    %c0_i32 = arith.constant 0 : i32
    %c0_i32_0 = arith.constant 0 : i32
    %c0_i32_1 = arith.constant 0 : i32
    return %c0_i32, %c0_i32_0 : i32, i32
  }
  func.func @transform_3(%arg0: i32) -> (i32, i32, i32) {
    %c0_i32 = arith.constant 0 : i32
    %c0_i32_0 = arith.constant 0 : i32
    %c0_i32_1 = arith.constant 0 : i32
    %c0_i32_2 = arith.constant 0 : i32
    return %c0_i32, %c0_i32_0, %c0_i32_1 : i32, i32, i32
  }
}

</mosaic_0001>

<llo_original>
// kernel: tpu_custom_call.1
$region0: #{tpu_custom_call.1}
  #allocation0 [shape = 'u32[]', space=smem, size = 0x4, offset = 0x4, fixed_abs, tag = 'smem constant byte address 0x4 - core index']
  #allocation1 [shape = 'u32[144,128]{1,0:T(1,128)}', space=vmem, size = 0x12000, scoped, tag = 'internal scratch']
  %s0 = inlined_call_operand.vmem [shape: f32[2,8,2], index: 0, kind: input, shape index: {}]
  %s1 = inlined_call_operand.vmem [shape: f32[2,8,1], index: 1, kind: input, shape index: {}]
  %s2 = inlined_call_operand.vmem [shape: f32[8,32], index: 2, kind: input, shape index: {}]
  %s3 = inlined_call_operand.vmem [shape: f32[2,9,32], index: 3, kind: output, shape index: {}]
  %s4 = sld [smem:[#allocation0]]
  $region22: #{tpu_custom_call.1} parent=0
    _
  %s6 = ssub.s32 1, %s4
  %s7 = scalar_select 0, %s6, %s4
  // Predicated region
  $region2: #{tpu_custom_call.1} parent=0 // pred_check
    _
  $region3: #{tpu_custom_call.1} parent=0 // pred_check_branch
    %9 = sbr.rel (0) target = $region5
  $region4: #{tpu_custom_call.1} parent=0 // pred_region
    _
  $region5: #{tpu_custom_call.1} parent=0 // pred_fallthru
    _
  // Predicated region
  $region6: #{tpu_custom_call.1} parent=0 // pred_check
    _
  $region7: #{tpu_custom_call.1} parent=0 // pred_check_branch
    %11 = sbr.rel (0) target = $region9
  $region8: #{tpu_custom_call.1} parent=0 // pred_region
    _
  $region9: #{tpu_custom_call.1} parent=0 // pred_fallthru
    _
  // Predicated region
  $region10: #{tpu_custom_call.1} parent=0 // pred_check
    _
  $region11: #{tpu_custom_call.1} parent=0 // pred_check_branch
    %13 = sbr.rel (0) target = $region13
  $region12: #{tpu_custom_call.1} parent=0 // pred_region
    _
  $region13: #{tpu_custom_call.1} parent=0 // pred_fallthru
    _
  %v14 = vld [vmem:[%s2] sm:$0xff]
  %v15 = vld [vmem:[%s0] sm:$0xff]
  %v16 = vld [vmem:[%s0 + $0x8] sm:$0xff]
  %18 = vset.pattern.permute.xlu0 0
  %19 = vperm.xlu0 %18, %v15
  %v20 = vpop.permute.xlu0 %19
  %23 = vset.pattern.permute.xlu0 0
  %24 = vperm.xlu0 %23, %v16
  %v25 = vpop.permute.xlu0 %24
  %v27 = vlaneseq
  %v28 = vshrl.u32 %v27, 7
  %v29 = vsub.s32 0, %v28
  %v30 = vrot.slane %v14, %v29
  %v31 = vmul.f32 %v20, %v30
  %v32 = vmul.f32 %v25, %v30
  %33 = vset.pattern.permute.xlu0 1
  %34 = vperm.xlu0 %33, %v15
  %v35 = vpop.permute.xlu0 %34
  %37 = vset.pattern.permute.xlu0 1
  %38 = vperm.xlu0 %37, %v16
  %v39 = vpop.permute.xlu0 %38
  %v41 = vlaneseq
  %v42 = vshrl.u32 %v41, 7
  %v43 = vsub.s32 1, %v42
  %v44 = vrot.slane %v14, %v43
  %v45 = vmul.f32 %v35, %v44
  %v46 = vmul.f32 %v39, %v44
  %v47 = vadd.f32 %v31, %v45
  %v48 = vadd.f32 %v32, %v46
  %v49 = vlaneseq
  %v50 = vshrl.u32 %v49, 7
  %v51 = vsub.s32 2, %v50
  %v52 = vrot.slane %v14, %v51
  %v53 = vadd.f32 %v47, %v52
  %v54 = vadd.f32 %v48, %v52
  %v55 = vand.u32 2147483647, %v53
  %vm56 = vcmp.le.f32.partialorder %v55, 0.7853982
  %vm57 = vcmp.lt.s32.totalorder %v53, 0
  %v58 = vand.u32 %v53, 2139095040
  %v59 = vshrl.u32 %v58, 23
  %v60 = vsub.s32 %v59, 127
  %v61 = vand.u32 2147483647, %v53
  %v62 = vand.u32 %v61, 8388607
  %v63 = vor.u32 %v62, 8388608
  %v64 = vsub.s32 0, %v63
  %v65 = vadd.s32 %v60, 1
  %vm66 = vcmp.gt.s32.totalorder %v65, 0
  %v67 = vsel %vm66, %v65, 0
  %v68 = vshrl.u32 %v67, 5
  %v69 = vand.u32 %v67, 31
  %v70 = vsub.s32 32, %v69
  %v71 = vshrl.u32 683565275, %v70
  %v72 = vshll.u32 683565275, %v69
  %v73 = vshrl.u32 2475754826, %v70
  %v74 = vor.u32 %v72, %v73
  %v75 = vshll.u32 2475754826, %v69
  %v76 = vshrl.u32 2131351028, %v70
  %v77 = vor.u32 %v75, %v76
  %v78 = vshll.u32 2131351028, %v69
  %v79 = vshrl.u32 2102212464, %v70
  %v80 = vor.u32 %v78, %v79
  %v81 = vshll.u32 2102212464, %v69
  %v82 = vshrl.u32 920167782, %v70
  %v83 = vor.u32 %v81, %v82
  %v84 = vshll.u32 920167782, %v69
  %v85 = vshrl.u32 1326507024, %v70
  %v86 = vor.u32 %v84, %v85
  %vm87 = vcmp.lt.s32.totalorder %v68, 1
  %vm88 = vcmp.lt.s32.totalorder %v68, 2
  %vm89 = vcmp.lt.s32.totalorder %v68, 3
  %vm90 = vcmp.lt.s32.totalorder %v68, 4
  %v91 = vsel %vm87, %v71, %v74
  %v92 = vsel %vm90, %v80, 2102212464
  %v93 = vsel %vm89, %v77, %v92
  %v94 = vsel %vm88, %v91, %v93
  %v95 = vsel %vm87, %v74, %v77
  %v96 = vsel %vm90, %v83, 920167782
  %v97 = vsel %vm89, %v80, %v96
  %v98 = vsel %vm88, %v95, %v97
  %v99 = vsel %vm87, %v77, %v80
  %v100 = vsel %vm90, %v86, 1326507024
  %v101 = vsel %vm89, %v83, %v100
  %v102 = vsel %vm88, %v99, %v101
  %v103 = vshll.u32 %v63, 8
  %v104 = vmul.u32.u64.compose %v103, %v102
  %v105 = vextract.low.u32 %v104
  %v106 = vextract.high.u32 %v104
  %v107 = vmul.u32.u64.compose %v103, %v98
  %v108 = vextract.low.u32 %v107
  %v109 = vextract.high.u32 %v107
  %v110 = vmul.u32 %v103, %v94
  %v111 = vadd.s32 %v106, %v108
  %vm112 = vc.u32 %v106, %v108
  %v113 = vadd.s32 %v109, 1
  %v114 = vsel %vm112, %v113, %v109
  %v115 = vadd.s32 %v110, %v114
  %v116 = vadd.s32 %v115, 536870912
  %v117 = vshrl.u32 %v116, 30
  %v118 = vshll.u32 %v117, 30
  %v119 = vsub.s32 %v115, %v118
  %vm120 = vcmp.lt.s32.totalorder %v119, 0
  %v121 = vsub.s32 0, %v119
  %v122 = vsel %vm120, %v121, %v119
  %v123 = vclz %v122
  %v124 = vsub.s32 %v123, 2
  %vm125 = vcmp.gt.s32.totalorder 0, %v124
  %v126 = vsel %vm125, 0, %v124
  %v127 = vsub.s32 32, %v126
  %v128 = vshll.u32 %v119, %v126
  %v129 = vshrl.u32 %v111, %v127
  %v130 = vor.u32 %v128, %v129
  %v131 = vsub.s32 4294967266, %v126
  %v132 = vadd.s32 %v131, 127
  %v133 = vshll.u32 %v132, 23
  %v134 = vor.u32 4788187, %v133
  %v135 = vand.u32 2147483647, %v134
  %v137 = vcvt.s32.f32 %v130
  %v138 = vmul.f32 %v137, %v135
  %v139 = vxor.u32 %v138, 2147483648
  %v140 = vsel %vm57, %v139, %v138
  %v141 = vsub.s32 4, %v117
  %v142 = vsel %vm57, %v141, %v117
  %v143 = vsel %vm56, %v53, %v140
  %v144 = vsel %vm56, 0, %v142
  %v145 = vcosq.f32.pop %v143
  %v146 = vsinq.f32.pop %v143
  %vm147 = vweird.f32 %v53
  %v148 = vadd.s32 %v144, 3
  %v149 = vand.u32 %v148, 3
  %vm150 = vcmp.lt.s32.totalorder %v149, 2
  %vm151 = vcmp.eq.s32.totalorder %v149, 0
  %v152 = vxor.u32 %v146, 2147483648
  %v153 = vsel %vm151, %v145, %v152
  %vm154 = vcmp.eq.s32.totalorder %v149, 2
  %v155 = vxor.u32 %v145, 2147483648
  %v156 = vsel %vm154, %v155, %v146
  %v157 = vsel %vm150, %v153, %v156
  %v158 = vsel %vm147, nan, %v157
  %v159 = vand.u32 2147483647, %v54
  %vm160 = vcmp.le.f32.partialorder %v159, 0.7853982
  %vm161 = vcmp.lt.s32.totalorder %v54, 0
  %v162 = vand.u32 %v54, 2139095040
  %v163 = vshrl.u32 %v162, 23
  %v164 = vsub.s32 %v163, 127
  %v165 = vand.u32 2147483647, %v54
  %v166 = vand.u32 %v165, 8388607
  %v167 = vor.u32 %v166, 8388608
  %v168 = vsub.s32 0, %v167
  %v169 = vadd.s32 %v164, 1
  %vm170 = vcmp.gt.s32.totalorder %v169, 0
  %v171 = vsel %vm170, %v169, 0
  %v172 = vshrl.u32 %v171, 5
  %v173 = vand.u32 %v171, 31
  %v174 = vsub.s32 32, %v173
  %v175 = vshrl.u32 683565275, %v174
  %v176 = vshll.u32 683565275, %v173
  %v177 = vshrl.u32 2475754826, %v174
  %v178 = vor.u32 %v176, %v177
  %v179 = vshll.u32 2475754826, %v173
  %v180 = vshrl.u32 2131351028, %v174
  %v181 = vor.u32 %v179, %v180
  %v182 = vshll.u32 2131351028, %v173
  %v183 = vshrl.u32 2102212464, %v174
  %v184 = vor.u32 %v182, %v183
  %v185 = vshll.u32 2102212464, %v173
  %v186 = vshrl.u32 920167782, %v174
  %v187 = vor.u32 %v185, %v186
  %v188 = vshll.u32 920167782, %v173
  %v189 = vshrl.u32 1326507024, %v174
  %v190 = vor.u32 %v188, %v189
  %vm191 = vcmp.lt.s32.totalorder %v172, 1
  %vm192 = vcmp.lt.s32.totalorder %v172, 2
  %vm193 = vcmp.lt.s32.totalorder %v172, 3
  %vm194 = vcmp.lt.s32.totalorder %v172, 4
  %v195 = vsel %vm191, %v175, %v178
  %v196 = vsel %vm194, %v184, 2102212464
  %v197 = vsel %vm193, %v181, %v196
  %v198 = vsel %vm192, %v195, %v197
  %v199 = vsel %vm191, %v178, %v181
  %v200 = vsel %vm194, %v187, 920167782
  %v201 = vsel %vm193, %v184, %v200
  %v202 = vsel %vm192, %v199, %v201
  %v203 = vsel %vm191, %v181, %v184
  %v204 = vsel %vm194, %v190, 1326507024
  %v205 = vsel %vm193, %v187, %v204
  %v206 = vsel %vm192, %v203, %v205
  %v207 = vshll.u32 %v167, 8
  %v208 = vmul.u32.u64.compose %v207, %v206
  %v209 = vextract.low.u32 %v208
  %v210 = vextract.high.u32 %v208
  %v211 = vmul.u32.u64.compose %v207, %v202
  %v212 = vextract.low.u32 %v211
  %v213 = vextract.high.u32 %v211
  %v214 = vmul.u32 %v207, %v198
  %v215 = vadd.s32 %v210, %v212
  %vm216 = vc.u32 %v210, %v212
  %v217 = vadd.s32 %v213, 1
  %v218 = vsel %vm216, %v217, %v213
  %v219 = vadd.s32 %v214, %v218
  %v220 = vadd.s32 %v219, 536870912
  %v221 = vshrl.u32 %v220, 30
  %v222 = vshll.u32 %v221, 30
  %v223 = vsub.s32 %v219, %v222
  %vm224 = vcmp.lt.s32.totalorder %v223, 0
  %v225 = vsub.s32 0, %v223
  %v226 = vsel %vm224, %v225, %v223
  %v227 = vclz %v226
  %v228 = vsub.s32 %v227, 2
  %vm229 = vcmp.gt.s32.totalorder 0, %v228
  %v230 = vsel %vm229, 0, %v228
  %v231 = vsub.s32 32, %v230
  %v232 = vshll.u32 %v223, %v230
  %v233 = vshrl.u32 %v215, %v231
  %v234 = vor.u32 %v232, %v233
  %v235 = vsub.s32 4294967266, %v230
  %v236 = vadd.s32 %v235, 127
  %v237 = vshll.u32 %v236, 23
  %v238 = vor.u32 4788187, %v237
  %v239 = vand.u32 2147483647, %v238
  %v241 = vcvt.s32.f32 %v234
  %v242 = vmul.f32 %v241, %v239
  %v243 = vxor.u32 %v242, 2147483648
  %v244 = vsel %vm161, %v243, %v242
  %v245 = vsub.s32 4, %v221
  %v246 = vsel %vm161, %v245, %v221
  %v247 = vsel %vm160, %v54, %v244
  %v248 = vsel %vm160, 0, %v246
  %v249 = vcosq.f32.pop %v247
  %v250 = vsinq.f32.pop %v247
  %vm251 = vweird.f32 %v54
  %v252 = vadd.s32 %v248, 3
  %v253 = vand.u32 %v252, 3
  %vm254 = vcmp.lt.s32.totalorder %v253, 2
  %vm255 = vcmp.eq.s32.totalorder %v253, 0
  %v256 = vxor.u32 %v250, 2147483648
  %v257 = vsel %vm255, %v249, %v256
  %vm258 = vcmp.eq.s32.totalorder %v253, 2
  %v259 = vxor.u32 %v249, 2147483648
  %v260 = vsel %vm258, %v259, %v250
  %v261 = vsel %vm254, %v257, %v260
  %v262 = vsel %vm251, nan, %v261
  %v263 = vld [vmem:[%s1] sm:$0xff]
  %v264 = vld [vmem:[%s1 + $0x8] sm:$0xff]
  %vm265 = vcmp.lt.f32.partialorder %v263, 0.0
  %vm266 = vcmp.lt.f32.partialorder %v264, 0.0
  %vm267 = vcmp.eq.f32.partialorder %v263, 0.0
  %vm268 = vcmp.eq.f32.partialorder %v264, 0.0
  %vm269 = vcmp.eq.f32.partialorder %v263, 1.0
  %vm270 = vcmp.eq.f32.partialorder %v264, 1.0
  %v271 = vsel %vm265, 1, 0
  %v272 = vsel %vm266, 1, 0
  %273 = vset.pattern.permute.xlu0 0
  %274 = vperm.xlu0 %273, %v271
  %v275 = vpop.permute.xlu0 %274
  %276 = vset.pattern.permute.xlu0 0
  %277 = vperm.xlu0 %276, %v272
  %v278 = vpop.permute.xlu0 %277
  %vm279 = vcmp.eq.s32.totalorder %v275, 1
  %vm280 = vcmp.eq.s32.totalorder %v278, 1
  %v281 = vlaneseq
  %v282 = vshrl.u32 %v281, 7
  %v283 = vsub.s32 3, %v282
  %v284 = vrot.slane %v14, %v283
  %v285 = vsel %vm279, %v284, %v158
  %v286 = vsel %vm280, %v284, %v262
  %v287 = vsel %vm269, 1, 0
  %v288 = vsel %vm270, 1, 0
  %289 = vset.pattern.permute.xlu0 0
  %290 = vperm.xlu0 %289, %v287
  %v291 = vpop.permute.xlu0 %290
  %292 = vset.pattern.permute.xlu0 0
  %293 = vperm.xlu0 %292, %v288
  %v294 = vpop.permute.xlu0 %293
  %vm295 = vcmp.eq.s32.totalorder %v291, 1
  %vm296 = vcmp.eq.s32.totalorder %v294, 1
  %v297 = vlaneseq
  %v298 = vshrl.u32 %v297, 7
  %v299 = vsub.s32 5, %v298
  %v300 = vrot.slane %v14, %v299
  %v301 = vsel %vm295, %v300, 0.0
  %v302 = vsel %vm296, %v300, 0.0
  %v303 = vsel %vm267, 1, 0
  %v304 = vsel %vm268, 1, 0
  %305 = vset.pattern.permute.xlu0 0
  %306 = vperm.xlu0 %305, %v303
  %v307 = vpop.permute.xlu0 %306
  %308 = vset.pattern.permute.xlu0 0
  %309 = vperm.xlu0 %308, %v304
  %v310 = vpop.permute.xlu0 %309
  %vm311 = vcmp.eq.s32.totalorder %v307, 1
  %vm312 = vcmp.eq.s32.totalorder %v310, 1
  %v313 = vlaneseq
  %v314 = vshrl.u32 %v313, 7
  %v315 = vsub.s32 4, %v314
  %v316 = vrot.slane %v14, %v315
  %v317 = vsel %vm311, %v316, %v301
  %v318 = vsel %vm312, %v316, %v302
  %v319 = vadd.f32 %v285, %v317
  %v320 = vadd.f32 %v286, %v318
  %vm321 = vcmask 261120
  %322 = vst.msk [vmem:[%s3] sm:$0xff] %vm321, %v319
  %323 = vst.msk [vmem:[%s3 + $0x10] sm:$0xff] %vm321, %v320
  %vm324 = vcmask 257027
  %325 = vst.msk [vmem:[%s3 + $0x5] sm:$0x8] %vm324, %v14
  %326 = vst.msk [vmem:[%s3 + $0x15] sm:$0x8] %vm324, %v14
  // Predicated region
  $region14: #{tpu_custom_call.1} parent=0 // pred_check
    _
  $region15: #{tpu_custom_call.1} parent=0 // pred_check_branch
    %328 = sbr.rel (0) target = $region17
  $region16: #{tpu_custom_call.1} parent=0 // pred_region
    _
  $region17: #{tpu_custom_call.1} parent=0 // pred_fallthru
    _
  // Predicated region
  $region18: #{tpu_custom_call.1} parent=0 // pred_check
    _
  $region19: #{tpu_custom_call.1} parent=0 // pred_check_branch
    %330 = sbr.rel (0) target = $region21
  $region20: #{tpu_custom_call.1} parent=0 // pred_region
    _
  $region21: #{tpu_custom_call.1} parent=0 // pred_fallthru
    _

</llo_original>
